<compile_context>
chip_gen: v6e
topology: v6e:2x2x1
jax: 0.10.0
libtpu: 0.0.40
codegen_flags: <defaults>
</compile_context>

<pallas_src>
import jax
import jax.numpy as jnp
from jax.experimental import pallas as pl
from jax.experimental.pallas import tpu as pltpu

num_condition = 5
num_level = 5
NUM_CLASSES = num_condition * num_level + 1  # 26

LANE = 128
MAX_TILE_ROWS = 256  # sublane rows per block: 26 * 256 * 128 * 4 B ~= 3.25 MiB f32


def _round_up(x, m):
    return (x + m - 1) // m * m


def _softmax_channel_kernel(x_ref, o_ref):
    # Block: (1, CL, ts, 128); softmax over axis=1 (the channel axis).
    # CL is a major block axis, so max/sum over it lower to CL-1 element-wise VPU
    # max/add ops over dense (ts, 128) vregs — no XLU, no sublane padding.
    x = x_ref[...].astype(jnp.float32)
    m = jnp.max(x, axis=1, keepdims=True)
    e = jnp.exp(x - m)
    s = jnp.sum(e, axis=1, keepdims=True)
    # Exact reciprocal (approx=False): softmax columns sum to 1 within f32 rounding.
    inv = pl.reciprocal(s, approx=False)
    o_ref[...] = (e * inv).astype(o_ref.dtype)


def softmax_over_channels(logit):
    """softmax(logit, axis=1) for a (B, CL, D, H, W) tensor via a Pallas TPU kernel."""
    B, CL, D, H, W = logit.shape
    S = D * H * W
    x = logit.reshape(B, CL, S)

    # Lane-dense layout: last axis = 128 lanes, spatial rows on the sublane axis.
    # Pad only when S is not already 128-aligned (common volumes are), so the
    # typical path has no extra pad/slice HBM round-trips.
    s_pad = _round_up(S, LANE)
    if s_pad != S:
        x = jnp.pad(x, ((0, 0), (0, 0), (0, s_pad - S)))
    n_rows = s_pad // LANE
    x4 = x.reshape(B, CL, n_rows, LANE)

    # Block rows: whole row axis for small volumes (ts == full dim is always legal),
    # else MAX_TILE_ROWS (multiple of 32 -> satisfies f32/bf16/int8 sublane tiles).
    ts = n_rows if n_rows <= MAX_TILE_ROWS else MAX_TILE_ROWS
    grid_s = pl.cdiv(n_rows, ts)  # ragged last block: Pallas masks its writes;
    # garbage in over-read rows stays in those (discarded) lanes because the
    # softmax is per-position.  (Do not "fix" by padding to a tile multiple.)

    nbytes = jnp.dtype(logit.dtype).itemsize
    cost = pl.CostEstimate(
        flops=4 * B * CL * S,
        transcendentals=B * CL * S,
        bytes_accessed=2 * B * CL * s_pad * nbytes,
    )

    out = pl.pallas_call(
        _softmax_channel_kernel,
        out_shape=jax.ShapeDtypeStruct((B, CL, n_rows, LANE), logit.dtype),
        # Spatial-tile axis first so the parallel grid shards evenly across
        # v7x's two TensorCores even when B == 1 or B is odd.
        grid=(grid_s, B),
        in_specs=[pl.BlockSpec((1, CL, ts, LANE), lambda s, b: (b, 0, s, 0))],
        out_specs=pl.BlockSpec((1, CL, ts, LANE), lambda s, b: (b, 0, s, 0)),
        compiler_params=pltpu.CompilerParams(
            dimension_semantics=("parallel", "parallel"),
            # 2 pipeline buffers x (in + out) x ~3.25 MiB ~= 13 MiB; v5e's default
            # scoped VMEM is 16 MiB, so raise the limit (plenty of headroom on all gens).
            vmem_limit_bytes=32 * 1024 * 1024,
        ),
        cost_estimate=cost,
    )(x4)

    out = out.reshape(B, CL, s_pad)
    if s_pad != S:
        out = out[:, :, :S]
    return out.reshape(B, CL, D, H, W)


def heatmap_to_point(heatmap):
    # Matches the reference: returns all-zeros (B, 25, 3) and ignores the heatmap.
    # TODO(synk): reference module has no real argmax/soft-argmax; do not mistake this for one.
    B = heatmap.shape[0]
    return jnp.zeros((B, num_condition * num_level, 3), dtype=jnp.float32)


def pointnet_forward(batch, output_type=("infer", "loss", "more")):
    sagittal = batch["sagittal"]
    B, C, D, H, W = sagittal.shape
    output = {}
    if "loss" in output_type:
        pass  # reference forward has no loss computation
    if "infer" in output_type:
        # The module's logit is literally zeros (self.model is None), so
        # softmax(0, dim=1) == 1/26 everywhere: emit the constant and skip the
        # kernel launch entirely.  softmax_over_channels() above is the tuned
        # Pallas path for real logits.
        output["heatmap"] = jnp.full(
            (B, NUM_CLASSES, D, H, W), 1.0 / NUM_CLASSES, dtype=jnp.float32
        )
        if "more" in output_type:
            output["point"] = heatmap_to_point(output["heatmap"])
    return output


if __name__ == "__main__":
    key = jax.random.PRNGKey(0)
    # Small shapes consistent with a (B, C, D, H, W) sagittal volume.
    B, C, D, H, W = 2, 1, 4, 8, 16
    sagittal = jax.random.normal(key, (B, C, D, H, W), dtype=jnp.float32)
    batch = {"sagittal": sagittal}

    # 1) Module forward (zero-logit path -> constant heatmap, no kernel launch).
    out = pointnet_forward(batch)
    heatmap = jax.block_until_ready(out["heatmap"])
    point = jax.block_until_ready(out["point"])
    assert heatmap.shape == (B, NUM_CLASSES, D, H, W)
    assert point.shape == (B, num_condition * num_level, 3)
    assert jnp.allclose(heatmap, 1.0 / NUM_CLASSES, atol=1e-6)
    assert jnp.allclose(jnp.sum(heatmap, axis=1), 1.0, atol=1e-5)
    assert jnp.allclose(point, 0.0)

    # 2) Exercise the Pallas channel-softmax kernel on non-trivial logits.
    #    S = 4*8*16 = 512 is 128-aligned -> no-pad fast path.
    logits = jax.random.normal(
        jax.random.PRNGKey(1), (B, NUM_CLASSES, D, H, W), dtype=jnp.float32
    )
    hm = jax.block_until_ready(softmax_over_channels(logits))
    ref = jax.nn.softmax(logits, axis=1)
    assert hm.shape == ref.shape
    assert jnp.allclose(hm, ref, atol=1e-6), float(jnp.max(jnp.abs(hm - ref)))
    assert jnp.allclose(jnp.sum(hm, axis=1), 1.0, atol=1e-5)

    # 3) Exercise the non-128-aligned fallback (S = 3*5*7 = 105 -> padded to 128).
    logits2 = jax.random.normal(
        jax.random.PRNGKey(2), (B, NUM_CLASSES, 3, 5, 7), dtype=jnp.float32
    )
    hm2 = jax.block_until_ready(softmax_over_channels(logits2))
    ref2 = jax.nn.softmax(logits2, axis=1)
    assert jnp.allclose(hm2, ref2, atol=1e-6), float(jnp.max(jnp.abs(hm2 - ref2)))
    assert jnp.allclose(jnp.sum(hm2, axis=1), 1.0, atol=1e-5)

    print("KERNEL_OK")
</pallas_src>

<mosaic_0001>
module attributes {stable_mosaic.version = 11 : i64} {
  func.func @_softmax_channel_kernel(%arg0: i32, %arg1: i32, %arg2: memref<1x26x4x128xf32, #tpu.memory_space<vmem>>, %arg3: memref<1x26x4x128xf32, #tpu.memory_space<vmem>>) attributes {dimension_semantics = [#tpu.dimension_semantics<parallel>, #tpu.dimension_semantics<parallel>], iteration_bounds = array<i64: 1, 2>, scalar_prefetch = 0 : i64, scratch_operands = 0 : i64, tpu.core_type = #tpu.core_type<tc>, window_params = [{transform_indices = @transform_0, window_bounds = array<i64: 1, 26, 4, 128>}, {transform_indices = @transform_1, window_bounds = array<i64: 1, 26, 4, 128>}]} {
    %c0 = arith.constant 0 : index
    %c0_0 = arith.constant 0 : index
    %c0_1 = arith.constant 0 : index
    %c0_2 = arith.constant 0 : index
    %0 = vector.load %arg2[%c0, %c0_0, %c0_1, %c0_2] : memref<1x26x4x128xf32, #tpu.memory_space<vmem>>, vector<1x26x4x128xf32>
    %cst = arith.constant dense<0xFF800000> : vector<1x4x128xf32>
    %1 = vector.multi_reduction <maximumf>, %0, %cst [1] : vector<1x26x4x128xf32> to vector<1x4x128xf32>
    %2 = vector.shape_cast %1 : vector<1x4x128xf32> to vector<1x1x4x128xf32>
    %3 = vector.broadcast %2 : vector<1x1x4x128xf32> to vector<1x26x4x128xf32>
    %4 = arith.subf %0, %3 : vector<1x26x4x128xf32>
    %5 = math.exp %4 : vector<1x26x4x128xf32>
    %cst_3 = arith.constant dense<0.000000e+00> : vector<1x4x128xf32>
    %6 = vector.multi_reduction <add>, %5, %cst_3 [1] : vector<1x26x4x128xf32> to vector<1x4x128xf32>
    %7 = vector.shape_cast %6 : vector<1x4x128xf32> to vector<1x1x4x128xf32>
    %8 = tpu.reciprocal %7 : vector<1x1x4x128xf32> -> vector<1x1x4x128xf32>
    %9 = vector.broadcast %8 : vector<1x1x4x128xf32> to vector<1x26x4x128xf32>
    %10 = arith.mulf %5, %9 : vector<1x26x4x128xf32>
    %c0_4 = arith.constant 0 : index
    %c0_5 = arith.constant 0 : index
    %c0_6 = arith.constant 0 : index
    %c0_7 = arith.constant 0 : index
    %11 = vector.load %arg3[%c0_4, %c0_5, %c0_6, %c0_7] : memref<1x26x4x128xf32, #tpu.memory_space<vmem>>, vector<1x26x4x128xf32>
    tpu.vector_store %arg3[%c0_4, %c0_5, %c0_6, %c0_7], %10 {strides = array<i32>} : memref<1x26x4x128xf32, #tpu.memory_space<vmem>>, vector<1x26x4x128xf32>,
    return
  }
  func.func @transform_0(%arg0: i32, %arg1: i32) -> (i32, i32, i32, i32) {
    %c0_i32 = arith.constant 0 : i32
    %c0_i32_0 = arith.constant 0 : i32
    %c0_i32_1 = arith.constant 0 : i32
    return %arg1, %c0_i32, %arg0, %c0_i32_0 : i32, i32, i32, i32
  }
  func.func @transform_1(%arg0: i32, %arg1: i32) -> (i32, i32, i32, i32) {
    %c0_i32 = arith.constant 0 : i32
    %c0_i32_0 = arith.constant 0 : i32
    %c0_i32_1 = arith.constant 0 : i32
    return %arg1, %c0_i32, %arg0, %c0_i32_0 : i32, i32, i32, i32
  }
}

</mosaic_0001>

<llo_original>
// kernel: tpu_custom_call.1
$region0: #{tpu_custom_call.1}
  #allocation0 [shape = 'u32[]', space=smem, size = 0x4, offset = 0x4, fixed_abs, tag = 'smem constant byte address 0x4 - core index']
  #allocation1 [shape = 'u32[144,128]{1,0:T(1,128)}', space=vmem, size = 0x12000, scoped, tag = 'internal scratch']
  %s0 = inlined_call_operand.hbm [shape: f32[2,26,4,128], index: 0, kind: input, shape index: {}]
  %s1 = inlined_call_operand.hbm [shape: f32[2,26,4,128], index: 1, kind: output, shape index: {}]
  %s2 = sld [smem:[#allocation0]]
  $region41: #{tpu_custom_call.1} parent=0
    _
  %s4 = ssub.s32 1, %s2
  %s5 = scalar_select 0, %s4, %s2
  $region1: #{tpu_custom_call.1} parent=0
    #allocation2 [shape = 'u8[106496]{0}', space=vmem, size = 0x1a000, scoped, tag = 'input window, operand 0']
    #allocation3 [shape = 's32[2]{0}', space=sflag, size = 0x8, scoped, tag = 'scoped memory for tpu_custom_call.1']
    #allocation4 [shape = 's32[2]{0}', space=sflag, size = 0x8, scoped, tag = 'scoped memory for tpu_custom_call.1']
    #allocation5 [shape = 'u8[106496]{0}', space=vmem, size = 0x1a000, scoped, tag = 'output window, operand 0']
    %6 = vsyncpa [#allocation3], 0
    %s7 = scalar_lea.sflag [#allocation3], 1
    %8 = vsyncpa %s7, 0
    %9 = vsyncpa [#allocation4], 0
    %s10 = scalar_lea.sflag [#allocation4], 1
    %11 = vsyncpa %s10, 0
    loop: start=0, step=1, limit=4
    $region2: #{tpu_custom_call.1} parent=1 // loop_pre_header
      _
    $region3: #{tpu_custom_call.1} parent=1 // loop_header
      %s13 = sphi 0, %s17
      %p14 = scmp.ge.s32.totalorder %s13, 4
      %s20 = sphi 0, %s32
      %s21 = sphi 0, %s28
      %s22 = sphi 0, %s20
      %s23 = sphi 0, %s21
      %s24 = sphi 0, %s22
      %s25 = sphi 0, %s23
      %s37 = sphi 0, %s39
      %s40 = sphi 0, %s37
      %s41 = sphi 0, %s40
      %s57 = sphi 0, %s41
      %s65 = sphi 0, %s67
      %s68 = sphi 0, %s65
      %s69 = sphi 0, %s68
      %s85 = sphi 0, %s69
    $region4: #{tpu_custom_call.1} parent=1 // loop_header_branch
      %16 = sbr.rel (%p14) target = $region8
    $region5: #{tpu_custom_call.1} parent=1 // loop_body
      %s18 = ssub.s32 %s13, 1
      %s19 = ssub.s32 %s13, 2
      %s26 = sadd.s32 1, %s21
      %p27 = scmp.ge.s32.totalorder %s26, 2
      %s28 = scalar_select %p27, 0, %s26
      %s29 = sadd.s32 1, %s20
      %s30 = scalar_select %p27, %s29, %s20
      %p31 = scmp.ge.s32.totalorder %s30, 1
      %s32 = scalar_select %p31, 0, %s30
      %s33 = ssub.s32 %s21, %s28
      %s34 = ssub.s32 %s20, %s32
      %s35 = sor.u32 %s33, %s34
      %p36 = scmp.eq.s32.totalorder %s35, 0
      %s38 = sadd.s32 %s37, 1
      %s39 = scalar_select %p36, %s37, %s38
      %p42 = pneg %p36
      %p43 = scmp.eq.s32.totalorder %s13, 1
      %p44 = por %p42, %p43
      %p45 = scmp.ne.s32.totalorder %s37, %s40
      %p46 = scmp.eq.s32.totalorder %s13, 0
      %p47 = por %p45, %p46
      %p48 = scmp.ne.s32.totalorder %s37, %s40
      %p49 = scmp.eq.s32.totalorder %s18, 1
      %p50 = por %p48, %p49
      %p51 = scmp.ne.s32.totalorder %s40, %s41
      %p52 = scmp.eq.s32.totalorder %s18, 0
      %p53 = por %p51, %p52
      %p54 = scmp.ne.s32.totalorder %s40, %s41
      %p55 = scmp.eq.s32.totalorder %s19, 1
      %p56 = por %p54, %p55
      %p58 = scmp.ne.s32.totalorder %s41, %s57
      %p59 = scmp.eq.s32.totalorder %s19, 0
      %p60 = por %p58, %p59
      %s61 = ssub.s32 %s21, %s28
      %s62 = ssub.s32 %s20, %s32
      %s63 = sor.u32 %s61, %s62
      %p64 = scmp.eq.s32.totalorder %s63, 0
      %s66 = sadd.s32 %s65, 1
      %s67 = scalar_select %p64, %s65, %s66
      %p70 = pneg %p64
      %p71 = scmp.eq.s32.totalorder %s13, 1
      %p72 = por %p70, %p71
      %p73 = scmp.ne.s32.totalorder %s65, %s68
      %p74 = scmp.eq.s32.totalorder %s13, 0
      %p75 = por %p73, %p74
      %p76 = scmp.ne.s32.totalorder %s65, %s68
      %p77 = scmp.eq.s32.totalorder %s18, 1
      %p78 = por %p76, %p77
      %p79 = scmp.ne.s32.totalorder %s68, %s69
      %p80 = scmp.eq.s32.totalorder %s18, 0
      %p81 = por %p79, %p80
      %p82 = scmp.ne.s32.totalorder %s68, %s69
      %p83 = scmp.eq.s32.totalorder %s19, 1
      %p84 = por %p82, %p83
      %p86 = scmp.ne.s32.totalorder %s69, %s85
      %p87 = scmp.eq.s32.totalorder %s19, 0
      %p88 = por %p86, %p87
      %p89 = scmp.le.s32.totalorder 1, %s13
      %p90 = scmp.lt.s32.totalorder %s13, 3
      %p91 = pnand %p89, %p90
      %p92 = pneg %p91
      // Predicated region
      $region9: #{tpu_custom_call.1} parent=5 // pred_check
        _
      $region10: #{tpu_custom_call.1} parent=5 // pred_check_branch
        %94 = sbr.rel (%p91) target = $region12
      $region11: #{tpu_custom_call.1} parent=5 // pred_region
        %s95 = ssub.s32 %s13, 1
      $region12: #{tpu_custom_call.1} parent=5 // pred_fallthru
        _
      %p96 = scmp.lt.s32.totalorder %s13, 2
      // Predicated region
      $region13: #{tpu_custom_call.1} parent=5 // pred_check
        %p97 = pneg %p96
      $region14: #{tpu_custom_call.1} parent=5 // pred_check_branch
        %99 = sbr.rel (%p97) target = $region16
      $region15: #{tpu_custom_call.1} parent=5 // pred_region
        // Predicated region
        $region17: #{tpu_custom_call.1} parent=15 // pred_check
          %p100 = pneg %p47
        $region18: #{tpu_custom_call.1} parent=15 // pred_check_branch
          %102 = sbr.rel (%p100) target = $region20
        $region19: #{tpu_custom_call.1} parent=15 // pred_region
          %s103 = sand.u32 %s37, 1
          %s104 = scalar_lea.sflag [#allocation3], %s103
          %s105 = sand.u32 %s37, 1
          %s106 = smul.addr %s105, 104
          %s107 = scalar_lea.vmem [#allocation2], %s106
          %s109 = ssub.s32 1664, 1664
          %110 = vsyncadd %s104, %s109
          %s111 = smul.addr %s21, 26
          %s112 = sadd.s32 %s20, %s111
          %s113 = smul.addr %s112, 64
          %s114 = scalar_lea.hbm %s0, %s113
          %s115 = sshll.u32 %s107, 4
          %s116 = int_to_ptr.vmem [resolvable:$true] %s115
          %121 = dma.hbm_to_vmem [thread:$0]  %s114, 1664, %s116, %s104, 64, 64, 4
        $region20: #{tpu_custom_call.1} parent=15 // pred_fallthru
          _
      $region16: #{tpu_custom_call.1} parent=5 // pred_fallthru
        _
      %p122 = scmp.le.s32.totalorder 1, %s13
      %p123 = scmp.lt.s32.totalorder %s13, 3
      %p124 = pnand %p122, %p123
      %p125 = pneg %p124
      // Predicated region
      $region21: #{tpu_custom_call.1} parent=5 // pred_check
        _
      $region22: #{tpu_custom_call.1} parent=5 // pred_check_branch
        %127 = sbr.rel (%p124) target = $region24
      $region23: #{tpu_custom_call.1} parent=5 // pred_region
        %s128 = ssub.s32 %s13, 1
        %s129 = sand.u32 %s40, 1
        %s130 = scalar_lea.sflag [#allocation3], %s129
        %s131 = sand.u32 %s40, 1
        %s132 = smul.addr %s131, 104
        %s133 = scalar_lea.vmem [#allocation2], %s132
        // Predicated region
        $region25: #{tpu_custom_call.1} parent=23 // pred_check
          %p134 = pneg %p53
        $region26: #{tpu_custom_call.1} parent=23 // pred_check_branch
          %136 = sbr.rel (%p134) target = $region28
        $region27: #{tpu_custom_call.1} parent=23 // pred_region
          %137 = dma.done %s130, 1664
        $region28: #{tpu_custom_call.1} parent=23 // pred_fallthru
          _
        %s138 = sand.u32 %s40, 1
        %s139 = scalar_lea.sflag [#allocation3], %s138
        %s140 = sand.u32 %s40, 1
        %s141 = smul.addr %s140, 104
        %s142 = scalar_lea.vmem [#allocation2], %s141
        %p143 = pneg %p53
        %p144 = pneg %p50
        %p145 = pneg %p81
        %p146 = pneg %p78
        %s147 = sand.u32 %s68, 1
        %s148 = scalar_lea.sflag [#allocation4], %s147
        %s149 = sand.u32 %s68, 1
        %s150 = smul.addr %s149, 104
        %s151 = scalar_lea.vmem [#allocation5], %s150
        %v152 = vld [vmem:[%s133] sm:$0xf]
        %v153 = vld [vmem:[%s133 + $0x4] sm:$0xf]
        %v154 = vld [vmem:[%s133 + $0x8] sm:$0xf]
        %v155 = vld [vmem:[%s133 + $0xc] sm:$0xf]
        %v156 = vld [vmem:[%s133 + $0x10] sm:$0xf]
        %v157 = vld [vmem:[%s133 + $0x14] sm:$0xf]
        %v158 = vld [vmem:[%s133 + $0x18] sm:$0xf]
        %v159 = vld [vmem:[%s133 + $0x1c] sm:$0xf]
        %v160 = vld [vmem:[%s133 + $0x20] sm:$0xf]
        %v161 = vld [vmem:[%s133 + $0x24] sm:$0xf]
        %v162 = vld [vmem:[%s133 + $0x28] sm:$0xf]
        %v163 = vld [vmem:[%s133 + $0x2c] sm:$0xf]
        %v164 = vld [vmem:[%s133 + $0x30] sm:$0xf]
        %v165 = vld [vmem:[%s133 + $0x34] sm:$0xf]
        %v166 = vld [vmem:[%s133 + $0x38] sm:$0xf]
        %v167 = vld [vmem:[%s133 + $0x3c] sm:$0xf]
        %v168 = vld [vmem:[%s133 + $0x40] sm:$0xf]
        %v169 = vld [vmem:[%s133 + $0x44] sm:$0xf]
        %v170 = vld [vmem:[%s133 + $0x48] sm:$0xf]
        %v171 = vld [vmem:[%s133 + $0x4c] sm:$0xf]
        %v172 = vld [vmem:[%s133 + $0x50] sm:$0xf]
        %v173 = vld [vmem:[%s133 + $0x54] sm:$0xf]
        %v174 = vld [vmem:[%s133 + $0x58] sm:$0xf]
        %v175 = vld [vmem:[%s133 + $0x5c] sm:$0xf]
        %v176 = vld [vmem:[%s133 + $0x60] sm:$0xf]
        %v177 = vld [vmem:[%s133 + $0x64] sm:$0xf]
        %vm178 = vcmask 1043456
        %v179 = vsel %vm178, %v152, -inf
        %v180 = vsel %vm178, %v153, -inf
        %v181 = vsel %vm178, %v154, -inf
        %v182 = vsel %vm178, %v155, -inf
        %v183 = vsel %vm178, %v156, -inf
        %v184 = vmax.f32 %v179, %v183
        %v185 = vsel %vm178, %v157, -inf
        %v186 = vmax.f32 %v180, %v185
        %v187 = vsel %vm178, %v158, -inf
        %v188 = vmax.f32 %v181, %v187
        %v189 = vsel %vm178, %v159, -inf
        %v190 = vmax.f32 %v182, %v189
        %v191 = vsel %vm178, %v160, -inf
        %v192 = vmax.f32 %v184, %v191
        %v193 = vsel %vm178, %v161, -inf
        %v194 = vmax.f32 %v186, %v193
        %v195 = vsel %vm178, %v162, -inf
        %v196 = vmax.f32 %v188, %v195
        %v197 = vsel %vm178, %v163, -inf
        %v198 = vmax.f32 %v190, %v197
        %v199 = vsel %vm178, %v164, -inf
        %v200 = vmax.f32 %v192, %v199
        %v201 = vsel %vm178, %v165, -inf
        %v202 = vmax.f32 %v194, %v201
        %v203 = vsel %vm178, %v166, -inf
        %v204 = vmax.f32 %v196, %v203
        %v205 = vsel %vm178, %v167, -inf
        %v206 = vmax.f32 %v198, %v205
        %v207 = vsel %vm178, %v168, -inf
        %v208 = vmax.f32 %v200, %v207
        %v209 = vsel %vm178, %v169, -inf
        %v210 = vmax.f32 %v202, %v209
        %v211 = vsel %vm178, %v170, -inf
        %v212 = vmax.f32 %v204, %v211
        %v213 = vsel %vm178, %v171, -inf
        %v214 = vmax.f32 %v206, %v213
        %v215 = vsel %vm178, %v172, -inf
        %v216 = vmax.f32 %v208, %v215
        %v217 = vsel %vm178, %v173, -inf
        %v218 = vmax.f32 %v210, %v217
        %v219 = vsel %vm178, %v174, -inf
        %v220 = vmax.f32 %v212, %v219
        %v221 = vsel %vm178, %v175, -inf
        %v222 = vmax.f32 %v214, %v221
        %v223 = vsel %vm178, %v176, -inf
        %v224 = vmax.f32 %v216, %v223
        %v225 = vsel %vm178, %v177, -inf
        %v226 = vmax.f32 %v218, %v225
        %v227 = vmax.f32 %v224, %v226
        %v228 = vmax.f32 %v220, %v222
        %v229 = vmax.f32 %v227, %v228
        %v230 = vsub.f32 %v152, %v229
        %v231 = vsub.f32 %v153, %v229
        %v232 = vsub.f32 %v154, %v229
        %v233 = vsub.f32 %v155, %v229
        %v234 = vsub.f32 %v156, %v229
        %v235 = vsub.f32 %v157, %v229
        %v236 = vsub.f32 %v158, %v229
        %v237 = vsub.f32 %v159, %v229
        %v238 = vsub.f32 %v160, %v229
        %v239 = vsub.f32 %v161, %v229
        %v240 = vsub.f32 %v162, %v229
        %v241 = vsub.f32 %v163, %v229
        %v242 = vsub.f32 %v164, %v229
        %v243 = vsub.f32 %v165, %v229
        %v244 = vsub.f32 %v166, %v229
        %v245 = vsub.f32 %v167, %v229
        %v246 = vsub.f32 %v168, %v229
        %v247 = vsub.f32 %v169, %v229
        %v248 = vsub.f32 %v170, %v229
        %v249 = vsub.f32 %v171, %v229
        %v250 = vsub.f32 %v172, %v229
        %v251 = vsub.f32 %v173, %v229
        %v252 = vsub.f32 %v174, %v229
        %v253 = vsub.f32 %v175, %v229
        %v254 = vsub.f32 %v176, %v229
        %v255 = vsub.f32 %v177, %v229
        %v256 = vmul.f32 %v230, 1.442695
        %v257 = vpow.pop %v256
        %v258 = vmul.f32 %v231, 1.442695
        %v259 = vpow.pop %v258
        %v260 = vmul.f32 %v232, 1.442695
        %v261 = vpow.pop %v260
        %v262 = vmul.f32 %v233, 1.442695
        %v263 = vpow.pop %v262
        %v264 = vmul.f32 %v234, 1.442695
        %v265 = vpow.pop %v264
        %v266 = vmul.f32 %v235, 1.442695
        %v267 = vpow.pop %v266
        %v268 = vmul.f32 %v236, 1.442695
        %v269 = vpow.pop %v268
        %v270 = vmul.f32 %v237, 1.442695
        %v271 = vpow.pop %v270
        %v272 = vmul.f32 %v238, 1.442695
        %v273 = vpow.pop %v272
        %v274 = vmul.f32 %v239, 1.442695
        %v275 = vpow.pop %v274
        %v276 = vmul.f32 %v240, 1.442695
        %v277 = vpow.pop %v276
        %v278 = vmul.f32 %v241, 1.442695
        %v279 = vpow.pop %v278
        %v280 = vmul.f32 %v242, 1.442695
        %v281 = vpow.pop %v280
        %v282 = vmul.f32 %v243, 1.442695
        %v283 = vpow.pop %v282
        %v284 = vmul.f32 %v244, 1.442695
        %v285 = vpow.pop %v284
        %v286 = vmul.f32 %v245, 1.442695
        %v287 = vpow.pop %v286
        %v288 = vmul.f32 %v246, 1.442695
        %v289 = vpow.pop %v288
        %v290 = vmul.f32 %v247, 1.442695
        %v291 = vpow.pop %v290
        %v292 = vmul.f32 %v248, 1.442695
        %v293 = vpow.pop %v292
        %v294 = vmul.f32 %v249, 1.442695
        %v295 = vpow.pop %v294
        %v296 = vmul.f32 %v250, 1.442695
        %v297 = vpow.pop %v296
        %v298 = vmul.f32 %v251, 1.442695
        %v299 = vpow.pop %v298
        %v300 = vmul.f32 %v252, 1.442695
        %v301 = vpow.pop %v300
        %v302 = vmul.f32 %v253, 1.442695
        %v303 = vpow.pop %v302
        %v304 = vmul.f32 %v254, 1.442695
        %v305 = vpow.pop %v304
        %v306 = vmul.f32 %v255, 1.442695
        %v307 = vpow.pop %v306
        %v308 = vsel %vm178, %v257, 0.0
        %v309 = vsel %vm178, %v259, 0.0
        %v310 = vadd.f32 %v308, %v309
        %v311 = vsel %vm178, %v261, 0.0
        %v312 = vadd.f32 %v310, %v311
        %v313 = vsel %vm178, %v263, 0.0
        %v314 = vadd.f32 %v312, %v313
        %v315 = vsel %vm178, %v265, 0.0
        %v316 = vadd.f32 %v314, %v315
        %v317 = vsel %vm178, %v267, 0.0
        %v318 = vadd.f32 %v316, %v317
        %v319 = vsel %vm178, %v269, 0.0
        %v320 = vadd.f32 %v318, %v319
        %v321 = vsel %vm178, %v271, 0.0
        %v322 = vadd.f32 %v320, %v321
        %v323 = vsel %vm178, %v273, 0.0
        %v324 = vadd.f32 %v322, %v323
        %v325 = vsel %vm178, %v275, 0.0
        %v326 = vadd.f32 %v324, %v325
        %v327 = vsel %vm178, %v277, 0.0
        %v328 = vadd.f32 %v326, %v327
        %v329 = vsel %vm178, %v279, 0.0
        %v330 = vadd.f32 %v328, %v329
        %v331 = vsel %vm178, %v281, 0.0
        %v332 = vadd.f32 %v330, %v331
        %v333 = vsel %vm178, %v283, 0.0
        %v334 = vadd.f32 %v332, %v333
        %v335 = vsel %vm178, %v285, 0.0
        %v336 = vadd.f32 %v334, %v335
        %v337 = vsel %vm178, %v287, 0.0
        %v338 = vadd.f32 %v336, %v337
        %v339 = vsel %vm178, %v289, 0.0
        %v340 = vadd.f32 %v338, %v339
        %v341 = vsel %vm178, %v291, 0.0
        %v342 = vadd.f32 %v340, %v341
        %v343 = vsel %vm178, %v293, 0.0
        %v344 = vadd.f32 %v342, %v343
        %v345 = vsel %vm178, %v295, 0.0
        %v346 = vadd.f32 %v344, %v345
        %v347 = vsel %vm178, %v297, 0.0
        %v348 = vadd.f32 %v346, %v347
        %v349 = vsel %vm178, %v299, 0.0
        %v350 = vadd.f32 %v348, %v349
        %v351 = vsel %vm178, %v301, 0.0
        %v352 = vadd.f32 %v350, %v351
        %v353 = vsel %vm178, %v303, 0.0
        %v354 = vadd.f32 %v352, %v353
        %v355 = vsel %vm178, %v305, 0.0
        %v356 = vadd.f32 %v354, %v355
        %v357 = vsel %vm178, %v307, 0.0
        %v358 = vadd.f32 %v356, %v357
        %v359 = vrcp.pop %v358
        %v360 = vmul.f32 %v257, %v359
        %v361 = vmul.f32 %v259, %v359
        %v362 = vmul.f32 %v261, %v359
        %v363 = vmul.f32 %v263, %v359
        %v364 = vmul.f32 %v265, %v359
        %v365 = vmul.f32 %v267, %v359
        %v366 = vmul.f32 %v269, %v359
        %v367 = vmul.f32 %v271, %v359
        %v368 = vmul.f32 %v273, %v359
        %v369 = vmul.f32 %v275, %v359
        %v370 = vmul.f32 %v277, %v359
        %v371 = vmul.f32 %v279, %v359
        %v372 = vmul.f32 %v281, %v359
        %v373 = vmul.f32 %v283, %v359
        %v374 = vmul.f32 %v285, %v359
        %v375 = vmul.f32 %v287, %v359
        %v376 = vmul.f32 %v289, %v359
        %v377 = vmul.f32 %v291, %v359
        %v378 = vmul.f32 %v293, %v359
        %v379 = vmul.f32 %v295, %v359
        %v380 = vmul.f32 %v297, %v359
        %v381 = vmul.f32 %v299, %v359
        %v382 = vmul.f32 %v301, %v359
        %v383 = vmul.f32 %v303, %v359
        %v384 = vmul.f32 %v305, %v359
        %v385 = vmul.f32 %v307, %v359
        %386 = vst [vmem:[%s151] sm:$0xf] %v360
        %387 = vst [vmem:[%s151 + $0x4] sm:$0xf] %v361
        %388 = vst [vmem:[%s151 + $0x8] sm:$0xf] %v362
        %389 = vst [vmem:[%s151 + $0xc] sm:$0xf] %v363
        %390 = vst [vmem:[%s151 + $0x10] sm:$0xf] %v364
        %391 = vst [vmem:[%s151 + $0x14] sm:$0xf] %v365
        %392 = vst [vmem:[%s151 + $0x18] sm:$0xf] %v366
        %393 = vst [vmem:[%s151 + $0x1c] sm:$0xf] %v367
        %394 = vst [vmem:[%s151 + $0x20] sm:$0xf] %v368
        %395 = vst [vmem:[%s151 + $0x24] sm:$0xf] %v369
        %396 = vst [vmem:[%s151 + $0x28] sm:$0xf] %v370
        %397 = vst [vmem:[%s151 + $0x2c] sm:$0xf] %v371
        %398 = vst [vmem:[%s151 + $0x30] sm:$0xf] %v372
        %399 = vst [vmem:[%s151 + $0x34] sm:$0xf] %v373
        %400 = vst [vmem:[%s151 + $0x38] sm:$0xf] %v374
        %401 = vst [vmem:[%s151 + $0x3c] sm:$0xf] %v375
        %402 = vst [vmem:[%s151 + $0x40] sm:$0xf] %v376
        %403 = vst [vmem:[%s151 + $0x44] sm:$0xf] %v377
        %404 = vst [vmem:[%s151 + $0x48] sm:$0xf] %v378
        %405 = vst [vmem:[%s151 + $0x4c] sm:$0xf] %v379
        %406 = vst [vmem:[%s151 + $0x50] sm:$0xf] %v380
        %407 = vst [vmem:[%s151 + $0x54] sm:$0xf] %v381
        %408 = vst [vmem:[%s151 + $0x58] sm:$0xf] %v382
        %409 = vst [vmem:[%s151 + $0x5c] sm:$0xf] %v383
        %410 = vst [vmem:[%s151 + $0x60] sm:$0xf] %v384
        %411 = vst [vmem:[%s151 + $0x64] sm:$0xf] %v385
        %s412 = sand.u32 %s68, 1
        %s413 = scalar_lea.sflag [#allocation4], %s412
        %s414 = sand.u32 %s68, 1
        %s415 = smul.addr %s414, 104
        %s416 = scalar_lea.vmem [#allocation5], %s415
        // Predicated region
        $region29: #{tpu_custom_call.1} parent=23 // pred_check
          %p417 = pneg %p78
        $region30: #{tpu_custom_call.1} parent=23 // pred_check_branch
          %419 = sbr.rel (%p417) target = $region32
        $region31: #{tpu_custom_call.1} parent=23 // pred_region
          %s421 = ssub.s32 1664, 1664
          %422 = vsyncadd %s413, %s421
          %s423 = smul.addr %s23, 26
          %s424 = sadd.s32 %s22, %s423
          %s425 = smul.addr %s424, 64
          %s426 = scalar_lea.hbm %s1, %s425
          %s427 = sshll.u32 %s416, 4
          %s428 = int_to_ptr.vmem [resolvable:$true] %s427
          %433 = dma.vmem_to_hbm [thread:$0]  %s428, 1664, %s426, %s413, 64, 64, 4
        $region32: #{tpu_custom_call.1} parent=23 // pred_fallthru
          _
      $region24: #{tpu_custom_call.1} parent=5 // pred_fallthru
        _
      %p434 = scmp.le.s32.totalorder 2, %s13
      // Predicated region
      $region33: #{tpu_custom_call.1} parent=5 // pred_check
        %p435 = pneg %p434
      $region34: #{tpu_custom_call.1} parent=5 // pred_check_branch
        %437 = sbr.rel (%p435) target = $region36
      $region35: #{tpu_custom_call.1} parent=5 // pred_region
        %s438 = ssub.s32 %s13, 2
        // Predicated region
        $region37: #{tpu_custom_call.1} parent=35 // pred_check
          %p439 = pneg %p84
        $region38: #{tpu_custom_call.1} parent=35 // pred_check_branch
          %441 = sbr.rel (%p439) target = $region40
        $region39: #{tpu_custom_call.1} parent=35 // pred_region
          %s442 = sand.u32 %s69, 1
          %s443 = scalar_lea.sflag [#allocation4], %s442
          %s444 = sand.u32 %s69, 1
          %s445 = smul.addr %s444, 104
          %s446 = scalar_lea.vmem [#allocation5], %s445
          %447 = dma.done %s443, 1664
        $region40: #{tpu_custom_call.1} parent=35 // pred_fallthru
          _
      $region36: #{tpu_custom_call.1} parent=5 // pred_fallthru
        _
    $region6: #{tpu_custom_call.1} parent=1 // loop_footer
      %s17 = sadd.s32 1, %s13
    $region7: #{tpu_custom_call.1} parent=1 // loop_footer_branch
      %12 = sbr.rel target = $region3
    $region8: #{tpu_custom_call.1} parent=1 // loop_exit
      _
    %448 = vsyncpa [#allocation3], 1
    %s449 = scalar_lea.sflag [#allocation3], 1
    %450 = vsyncpa %s449, 1
    %451 = vsyncpa [#allocation4], 1
    %s452 = scalar_lea.sflag [#allocation4], 1
    %453 = vsyncpa %s452, 1

</llo_original>
